<compile_context>
chip_gen: v7x
topology: tpu7x:2x2x1
jax: 0.10.0
libtpu: 0.0.40
codegen_flags: <defaults>
</compile_context>

<pallas_src>
import math

import jax
import jax.numpy as jnp
from jax import lax
from jax.experimental import pallas as pl
from jax.experimental.pallas import tpu as pltpu


def _round_up(x, m):
    return (x + m - 1) // m * m


def _cdiv(x, m):
    return (x + m - 1) // m


def _sublane_rows(dtype):
    """Rows packed per 32-bit sublane tile: f32 -> 8, bf16 -> 16, int8 -> 32."""
    itemsize = jnp.dtype(dtype).itemsize
    return 8 * max(1, 4 // itemsize)


def _gram_kernel(x_ref, g_ref):
    """Streaming accumulation of the big Gram:  G += X_tile @ X_tile^T  (f32)."""
    k = pl.program_id(1)

    @pl.when(k == 0)
    def _():
        g_ref[...] = jnp.zeros_like(g_ref)

    x = x_ref[...]
    # Contract over the feature (lane) axis of both operands: (R, C) x (R, C)
    # -> (R, R) with f32 MXU accumulation.  bf16 inputs stay bf16 (each
    # product is exact in the f32 accumulator, identical to an f32 upcast).
    g_ref[...] += lax.dot_general(
        x, x, (((1,), (1,)), ((), ())), preferred_element_type=jnp.float32)


def _gram(x2d, *, rows_target=None, tile_c=None, block_bytes=8 << 20):
    """Row Gram G[i, j] = x_i . x_j of a (B, D) array via a streaming Pallas kernel."""
    b, d = x2d.shape
    dtype = x2d.dtype
    itemsize = jnp.dtype(dtype).itemsize

    if rows_target is None:
        # MXU weight width is 256 on v6e/v7x and 128 on v5e.  128 rows already
        # give 16 LHS pushes per weight-chunk load (vs 1 at B=2) and keep the
        # multi-pass f32 matmul comfortably under the HBM roofline on every
        # generation; bf16 halves the streamed bytes, so fill 256 rows.
        rows_target = 256 if itemsize <= 2 else 128

    # --- split each row into S sub-rows so the matmul fills the MXU ---------
    # S is capped by D // 128 so every sub-row keeps >= 128 real features
    # (avoids blowing up small-D inputs with lane padding).
    s = max(1, min(rows_target // max(b, 1), max(1, d // 128)))
    # Prefer B*S a multiple of 8 so no zero-row padding copy is needed.
    step = 8 // math.gcd(b, 8)
    if s >= step:
        s = (s // step) * step
    r = b * s
    r_pad = _round_up(r, 8)

    cols_needed = _cdiv(d, s)                      # features per sub-row

    # --- tile size from the *sublane-padded* VMEM footprint -----------------
    pack = _sublane_rows(dtype)
    row_bytes = _round_up(r_pad, pack) * itemsize  # bytes per feature column
    if tile_c is None:
        tile_c = max(128, (block_bytes // row_bytes) // 128 * 128)
        num_tiles = _cdiv(cols_needed, tile_c)
        split = 2 if num_tiles >= 2 else 1         # feed both v7x TensorCores
        num_tiles = _round_up(num_tiles, split)
        tile_c = _round_up(_cdiv(cols_needed, num_tiles), 128)  # rebalance
    else:
        tile_c = _round_up(tile_c, 128)
        num_tiles = _cdiv(cols_needed, tile_c)
        split = 2 if num_tiles >= 2 else 1
        num_tiles = _round_up(num_tiles, split)
    cols = num_tiles * tile_c
    d_pad = s * cols
    tiles_per_split = num_tiles // split

    # --- wrapper-side layout (zero pads are exact no-ops for the Gram) ------
    x = x2d
    if d_pad != d:
        x = jnp.pad(x, ((0, 0), (0, d_pad - d)))
    y = x.reshape(r, cols)                         # free row-major reshape
    if r_pad != r:
        y = jnp.pad(y, ((0, r_pad - r), (0, 0)))   # zero rows -> zero Gram rows

    # Explicit scoped-VMEM budget from the padded footprint: one
    # double-buffered input block + the resident output block (+ margin for
    # Mosaic internal scratch).  Stays <= physical VMEM on v5e/v6e/v7x.
    in_block = _round_up(r_pad, pack) * tile_c * itemsize
    out_block = _round_up(r_pad, 8) * r_pad * 4
    vmem_limit = 2 * in_block + 2 * out_block + (4 << 20)
    vmem_limit = int(max(vmem_limit, 32 << 20))

    big = pl.pallas_call(
        _gram_kernel,
        out_shape=jax.ShapeDtypeStruct((split, r_pad, r_pad), jnp.float32),
        grid_spec=pltpu.PrefetchScalarGridSpec(
            num_scalar_prefetch=0,
            grid=(split, tiles_per_split),
            in_specs=[pl.BlockSpec(
                (r_pad, tile_c),
                lambda c, k: (0, c * tiles_per_split + k))],
            out_specs=pl.BlockSpec(
                (None, r_pad, r_pad), lambda c, k: (c, 0, 0)),
        ),
        compiler_params=pltpu.CompilerParams(
            dimension_semantics=("parallel", "arbitrary"),
            vmem_limit_bytes=vmem_limit,
        ),
    )(y)

    # Tiny epilogue in plain JAX: sum per-split partials, drop padded rows,
    # and collapse the s-diagonal of the big Gram back to (B, B):
    #   G[i, j] = sum_s big[i*S + s, j*S + s] == x_i . x_j
    bigg = big.sum(axis=0)[:r, :r]
    big4 = bigg.reshape(b, s, b, s)
    return jnp.diagonal(big4, axis1=1, axis2=3).sum(axis=-1)


def diff_loss(input1, input2, *, rows_target=None, tile_c=None):
    """Pallas DiffLoss forward; accepts arbitrary-rank inputs, flattens to (B, -1)."""
    b = input1.shape[0]
    x1 = input1.reshape(b, -1)
    x2 = input2.reshape(b, -1)
    d1, d2 = x1.shape[1], x2.shape[1]

    g1 = _gram(x1, rows_target=rows_target, tile_c=tile_c)
    g2 = _gram(x2, rows_target=rows_target, tile_c=tile_c)

    eps = jnp.float32(1e-6)
    n1 = jnp.sqrt(jnp.diagonal(g1)) + eps          # ||x1_i|| + 1e-6  (detach: fwd no-op)
    n2 = jnp.sqrt(jnp.diagonal(g2)) + eps
    g1n = g1 / (n1[:, None] * n1[None, :])         # == a1_i . a1_j
    g2n = g2 / (n2[:, None] * n2[None, :])
    # mean over the (D1, D2) entries of (a1^T a2)^2, folded into one divide.
    return jnp.sum(g1n * g2n) / jnp.float32(d1 * d2)


def diff_loss_ref(input1, input2):
    """Plain-JAX reference matching the torch forward exactly."""
    b = input1.shape[0]
    x1 = input1.reshape(b, -1).astype(jnp.float32)
    x2 = input2.reshape(b, -1).astype(jnp.float32)
    a1 = x1 / (jnp.linalg.norm(x1, axis=1, keepdims=True) + 1e-6)
    a2 = x2 / (jnp.linalg.norm(x2, axis=1, keepdims=True) + 1e-6)
    m = a1.T @ a2
    return jnp.mean(m ** 2)


if __name__ == "__main__":
    key = jax.random.PRNGKey(0)
    k1, k2, k3 = jax.random.split(key, 3)

    # Small NCHW-style feature maps, as the two branch heads would produce.
    input1 = jax.random.normal(k1, (2, 4, 16, 16), dtype=jnp.float32)   # D1 = 1024
    input2 = jax.random.normal(k2, (2, 4, 16, 16), dtype=jnp.float32)   # D2 = 1024

    ref = diff_loss_ref(input1, input2)

    # Default path (auto sub-row / tile sizing).
    loss = diff_loss(input1, input2)
    jax.block_until_ready(loss)
    assert jnp.allclose(loss, ref, rtol=1e-4, atol=1e-8), (loss, ref)

    # Multi-tile + 2-way parallel split (exercises the "parallel" axis, the
    # k-axis accumulation, and the zero-row padding path).
    loss_t = diff_loss(input1, input2, rows_target=4, tile_c=128)
    jax.block_until_ready(loss_t)
    assert jnp.allclose(loss_t, ref, rtol=1e-4, atol=1e-8), (loss_t, ref)

    # Unequal, non-128-multiple feature dims (no cross-input padding).
    input3 = jax.random.normal(k3, (2, 3, 10, 10), dtype=jnp.float32)   # D2 = 300
    loss_u = diff_loss(input1, input3)
    jax.block_until_ready(loss_u)
    ref_u = diff_loss_ref(input1, input3)
    assert jnp.allclose(loss_u, ref_u, rtol=1e-4, atol=1e-8), (loss_u, ref_u)

    # bf16 inputs stream at half the bytes; products stay exact in f32.
    x1b = input1.astype(jnp.bfloat16)
    x2b = input2.astype(jnp.bfloat16)
    loss_b = diff_loss(x1b, x2b)
    jax.block_until_ready(loss_b)
    ref_b = diff_loss_ref(x1b, x2b)
    assert jnp.allclose(loss_b, ref_b, rtol=2e-3, atol=1e-8), (loss_b, ref_b)

    print("KERNEL_OK")
</pallas_src>

<mosaic_0001>
module attributes {stable_mosaic.version = 11 : i64} {
  func.func @_gram_kernel(%arg0: i32, %arg1: i32, %arg2: memref<16x128xf32, #tpu.memory_space<vmem>>, %arg3: memref<1x16x16xf32, #tpu.memory_space<vmem>>) attributes {dimension_semantics = [#tpu.dimension_semantics<parallel>, #tpu.dimension_semantics<arbitrary>], iteration_bounds = array<i64: 1, 1>, scalar_prefetch = 0 : i64, scratch_operands = 0 : i64, tpu.core_type = #tpu.core_type<tc>, window_params = [{transform_indices = @transform_0, window_bounds = array<i64: 16, 128>}, {transform_indices = @transform_1, window_bounds = array<i64: 1, 16, 16>}]} {
    %c0_i32 = arith.constant 0 : i32
    %0 = arith.cmpi eq, %arg1, %c0_i32 : i32
    %1 = arith.extui %0 : i1 to i32
    %c0_i32_0 = arith.constant 0 : i32
    %2 = arith.cmpi ne, %1, %c0_i32_0 : i32
    scf.if %2 {
      %cst_8 = arith.constant 0.000000e+00 : f32
      %11 = vector.broadcast %cst_8 : f32 to vector<16x16xf32>
      %c0_9 = arith.constant 0 : index
      %c0_10 = arith.constant 0 : index
      %c0_11 = arith.constant 0 : index
      %12 = vector.load %arg3[%c0_9, %c0_10, %c0_11] : memref<1x16x16xf32, #tpu.memory_space<vmem>>, vector<1x16x16xf32>
      %13 = vector.shape_cast %12 : vector<1x16x16xf32> to vector<16x16xf32>
      %14 = vector.shape_cast %11 : vector<16x16xf32> to vector<1x16x16xf32>
      tpu.vector_store %arg3[%c0_9, %c0_10, %c0_11], %14 {strides = array<i32>} : memref<1x16x16xf32, #tpu.memory_space<vmem>>, vector<1x16x16xf32>,
    } else {
    }
    %c0 = arith.constant 0 : index
    %c0_1 = arith.constant 0 : index
    %3 = vector.load %arg2[%c0, %c0_1] : memref<16x128xf32, #tpu.memory_space<vmem>>, vector<16x128xf32>
    %c0_2 = arith.constant 0 : index
    %c0_3 = arith.constant 0 : index
    %c0_4 = arith.constant 0 : index
    %4 = vector.load %arg3[%c0_2, %c0_3, %c0_4] : memref<1x16x16xf32, #tpu.memory_space<vmem>>, vector<1x16x16xf32>
    %5 = vector.shape_cast %4 : vector<1x16x16xf32> to vector<16x16xf32>
    %cst = arith.constant dense<0.000000e+00> : vector<16x16xf32>
    %6 = tpu.matmul %3, %3, %cst {dimension_numbers = #tpu.dot_dimension_numbers<[1], [1], [0], [0], [0, 0, 1, 0], [], []>} : vector<16x128xf32>, vector<16x128xf32>, vector<16x16xf32> -> vector<16x16xf32>
    %7 = arith.addf %5, %6 : vector<16x16xf32>
    %c0_5 = arith.constant 0 : index
    %c0_6 = arith.constant 0 : index
    %c0_7 = arith.constant 0 : index
    %8 = vector.load %arg3[%c0_5, %c0_6, %c0_7] : memref<1x16x16xf32, #tpu.memory_space<vmem>>, vector<1x16x16xf32>
    %9 = vector.shape_cast %8 : vector<1x16x16xf32> to vector<16x16xf32>
    %10 = vector.shape_cast %7 : vector<16x16xf32> to vector<1x16x16xf32>
    tpu.vector_store %arg3[%c0_5, %c0_6, %c0_7], %10 {strides = array<i32>} : memref<1x16x16xf32, #tpu.memory_space<vmem>>, vector<1x16x16xf32>,
    return
  }
  func.func @transform_0(%arg0: i32, %arg1: i32) -> (i32, i32) {
    %c1_i32 = arith.constant 1 : i32
    %0 = arith.muli %arg0, %c1_i32 : i32
    %1 = arith.addi %0, %arg1 : i32
    %c0_i32 = arith.constant 0 : i32
    %c0_i32_0 = arith.constant 0 : i32
    return %c0_i32, %1 : i32, i32
  }
  func.func @transform_1(%arg0: i32, %arg1: i32) -> (i32, i32, i32) {
    %c0_i32 = arith.constant 0 : i32
    %c0_i32_0 = arith.constant 0 : i32
    %c0_i32_1 = arith.constant 0 : i32
    return %arg0, %c0_i32, %c0_i32_0 : i32, i32, i32
  }
}

</mosaic_0001>

<llo_original>
// kernel: tpu_custom_call.1
$region0: #{tpu_custom_call.1}
  #allocation0 [shape = 'u32[]', space=smem, size = 0x4, offset = 0x4, fixed_abs, tag = 'smem constant byte address 0x4 - core index']
  #allocation1 [shape = 'u32[144,128]{1,0:T(1,128)}', space=vmem, size = 0x12000, scoped, tag = 'internal scratch']
  %s0 = inlined_call_operand.hbm [shape: f32[16,128], index: 0, kind: input, shape index: {}]
  %s1 = inlined_call_operand.hbm [shape: f32[1,16,16], index: 1, kind: output, shape index: {}]
  %s2 = sld [smem:[#allocation0]]
  $region22: #{tpu_custom_call.1} parent=0
    _
  %s4 = ssub.s32 1, %s2
  %s5 = scalar_select 0, %s4, %s2
  $region1: #{tpu_custom_call.1} parent=0
    #allocation2 [shape = 'u8[8192]{0}', space=vmem, size = 0x2000, scoped, tag = 'input window, operand 0, single buffered']
    #allocation3 [shape = 's32[1]{0}', space=sflag, size = 0x4, scoped, tag = 'scoped memory for tpu_custom_call.1']
    #allocation4 [shape = 's32[1]{0}', space=sflag, size = 0x4, scoped, tag = 'scoped memory for tpu_custom_call.1']
    #allocation5 [shape = 'u8[8192]{0}', space=vmem, size = 0x2000, scoped, tag = 'output window, operand 0, single buffered']
    %6 = vsyncpa [#allocation3], 0
    %7 = vsyncpa [#allocation4], 0
    // Predicated region
    $region2: #{tpu_custom_call.1} parent=1 // pred_check
      _
    $region3: #{tpu_custom_call.1} parent=1 // pred_check_branch
      %9 = sbr.rel (0) target = $region5
    $region4: #{tpu_custom_call.1} parent=1 // pred_region
      %s10 = sadd.s32 0, 0
      %s12 = ssub.s32 256, 256
      %13 = vsyncadd [#allocation3], %s12
      %s14 = smul.addr %s10, 128
      %s15 = scalar_lea.hbm %s0, %s14
      %s16 = sshll.u32 [#allocation2], 4
      %s17 = int_to_ptr.vmem [resolvable:$true] %s16
      %22 = dma.hbm_to_vmem [thread:$0]  %s15, 256, %s17, [#allocation3], 128, 128, 8
    $region5: #{tpu_custom_call.1} parent=1 // pred_fallthru
      _
    // Predicated region
    $region6: #{tpu_custom_call.1} parent=1 // pred_check
      _
    $region7: #{tpu_custom_call.1} parent=1 // pred_check_branch
      %24 = sbr.rel (0) target = $region9
    $region8: #{tpu_custom_call.1} parent=1 // pred_region
      %25 = dma.done [#allocation3], 256
    $region9: #{tpu_custom_call.1} parent=1 // pred_fallthru
      _
    %s26 = sadd.s32 0, 0
    %p27 = scmp.eq.s32.totalorder 0, 0
    // Predicated region
    $region10: #{tpu_custom_call.1} parent=1 // pred_check
      %p28 = pneg %p27
    $region11: #{tpu_custom_call.1} parent=1 // pred_check_branch
      %30 = sbr.rel (%p28) target = $region13
    $region12: #{tpu_custom_call.1} parent=1 // pred_region
      %vm31 = vcmask 130048
      %32 = vst.msk [vmem:[#allocation5] sm:$0xff] %vm31, 0.0
      %33 = vst.msk [vmem:[#allocation5 + $0x8] sm:$0xff] %vm31, 0.0
    $region13: #{tpu_custom_call.1} parent=1 // pred_fallthru
      _
    %v34 = vld [vmem:[#allocation2] sm:$0xff]
    %v35 = vld [vmem:[#allocation2 + $0x8] sm:$0xff]
    %v36 = vld [vmem:[#allocation5] sm:$0xff]
    %v37 = vld [vmem:[#allocation5 + $0x8] sm:$0xff]
    %38 = vmatprep.subr.mxu0 0.0
    %39 = vmatpush1.xpose.msra.mxu0 %v34
    %40 = vmatprep.subr.mxu0 0.0
    %41 = vmatpush1.xpose.msra.mxu0 %v35
    %42 = vmatprep.subr.mxu0 0.0
    %43 = vmatpush1.xpose.msra.mxu0 0.0
    %44 = vmatprep.subr.mxu0 0.0
    %45 = vmatpush1.xpose.msra.mxu0 0.0
    %46 = vmatprep.subr.mxu0 0.0
    %47 = vmatpush1.xpose.msra.mxu0 0.0
    %48 = vmatprep.subr.mxu0 0.0
    %49 = vmatpush1.xpose.msra.mxu0 0.0
    %50 = vmatprep.subr.mxu0 0.0
    %51 = vmatpush1.xpose.msra.mxu0 0.0
    %52 = vmatprep.subr.mxu0 0.0
    %53 = vmatpush1.xpose.msra.mxu0 0.0
    %54 = vmatprep.subr.mxu0 0.0
    %55 = vmatpush1.xpose.msra.mxu0 0.0
    %56 = vmatprep.subr.mxu0 0.0
    %57 = vmatpush1.xpose.msra.mxu0 0.0
    %58 = vmatprep.subr.mxu0 0.0
    %59 = vmatpush1.xpose.msra.mxu0 0.0
    %60 = vmatprep.subr.mxu0 0.0
    %61 = vmatpush1.xpose.msra.mxu0 0.0
    %62 = vmatprep.subr.mxu0 0.0
    %63 = vmatpush1.xpose.msra.mxu0 0.0
    %64 = vmatprep.subr.mxu0 0.0
    %65 = vmatpush1.xpose.msra.mxu0 0.0
    %66 = vmatprep.subr.mxu0 0.0
    %67 = vmatpush1.xpose.msra.mxu0 0.0
    %68 = vmatprep.subr.mxu0 0.0
    %69 = vmatpush1.xpose.msra.mxu0 0.0
    %70 = vmatprep.subr.mxu0 0.0
    %71 = vmatpush1.xpose.msra.mxu0 0.0
    %72 = vmatprep.subr.mxu0 0.0
    %73 = vmatpush1.xpose.msra.mxu0 0.0
    %74 = vmatprep.subr.mxu0 0.0
    %75 = vmatpush1.xpose.msra.mxu0 0.0
    %76 = vmatprep.subr.mxu0 0.0
    %77 = vmatpush1.xpose.msra.mxu0 0.0
    %78 = vmatprep.subr.mxu0 0.0
    %79 = vmatpush1.xpose.msra.mxu0 0.0
    %80 = vmatprep.subr.mxu0 0.0
    %81 = vmatpush1.xpose.msra.mxu0 0.0
    %82 = vmatprep.subr.mxu0 0.0
    %83 = vmatpush1.xpose.msra.mxu0 0.0
    %84 = vmatprep.subr.mxu0 0.0
    %85 = vmatpush1.xpose.msra.mxu0 0.0
    %86 = vmatprep.subr.mxu0 0.0
    %87 = vmatpush1.xpose.msra.mxu0 0.0
    %88 = vmatprep.subr.mxu0 0.0
    %89 = vmatpush1.xpose.msra.mxu0 0.0
    %90 = vmatprep.subr.mxu0 0.0
    %91 = vmatpush1.xpose.msra.mxu0 0.0
    %92 = vmatprep.subr.mxu0 0.0
    %93 = vmatpush1.xpose.msra.mxu0 0.0
    %94 = vmatprep.subr.mxu0 0.0
    %95 = vmatpush1.xpose.msra.mxu0 0.0
    %96 = vmatprep.subr.mxu0 0.0
    %97 = vmatpush1.xpose.msra.mxu0 0.0
    %98 = vmatprep.subr.mxu0 0.0
    %99 = vmatpush1.xpose.msra.mxu0 0.0
    %100 = vmatprep.subr.mxu0 0.0
    %101 = vmatpush1.xpose.msra.mxu0 0.0
    %102 = vmatprep.mubr.f32.mxu0 0.0
    %103 = vmatmul.mubr.f32.gmra.mrb[0].mxu0 %v34
    %v104 = vpop.f32.mrb[0].mxu0
    %v105 = vadd.f32 0.0, %v104
    %v106 = vpop.f32.mrb[0].mxu0
    %107 = vmatprep.mubr.f32.mxu0 0.0
    %108 = vmatmul.mubr.f32.gmra.mrb[0].mxu0 %v35
    %v109 = vpop.f32.mrb[0].mxu0
    %v110 = vadd.f32 0.0, %v109
    %v111 = vpop.f32.mrb[0].mxu0
    %112 = vdwg.mxu0
    %v113 = vadd.f32 %v36, %v105
    %v114 = vadd.f32 %v37, %v110
    %vm115 = vcmask 130048
    %116 = vst.msk [vmem:[#allocation5] sm:$0xff] %vm115, %v113
    %117 = vst.msk [vmem:[#allocation5 + $0x8] sm:$0xff] %vm115, %v114
    // Predicated region
    $region14: #{tpu_custom_call.1} parent=1 // pred_check
      _
    $region15: #{tpu_custom_call.1} parent=1 // pred_check_branch
      %119 = sbr.rel (0) target = $region17
    $region16: #{tpu_custom_call.1} parent=1 // pred_region
      %s121 = ssub.s32 256, 256
      %122 = vsyncadd [#allocation4], %s121
      %s123 = sshll.u32 [#allocation5], 4
      %s124 = int_to_ptr.vmem [resolvable:$true] %s123
      %129 = dma.vmem_to_hbm [thread:$0]  %s124, 256, %s1, [#allocation4], 128, 128, 8
    $region17: #{tpu_custom_call.1} parent=1 // pred_fallthru
      _
    // Predicated region
    $region18: #{tpu_custom_call.1} parent=1 // pred_check
      _
    $region19: #{tpu_custom_call.1} parent=1 // pred_check_branch
      %131 = sbr.rel (0) target = $region21
    $region20: #{tpu_custom_call.1} parent=1 // pred_region
      %132 = dma.done [#allocation4], 256
    $region21: #{tpu_custom_call.1} parent=1 // pred_fallthru
      _
    %133 = vsyncpa [#allocation3], 1
    %134 = vsyncpa [#allocation4], 1

</llo_original>
